<compile_context>
chip_gen: v6e
topology: v6e:2x2x1
jax: 0.10.0
libtpu: 0.0.40
codegen_flags: <defaults>
</compile_context>

<pallas_src>
import functools

import jax
import jax.numpy as jnp
from jax import lax
from jax.experimental import pallas as pl
from jax.experimental.pallas import tpu as pltpu


def _round_up(x, m):
    return (x + m - 1) // m * m


# ---------------------------------------------------------------------------
# Shared MLP head: fc1 -> LeakyReLU(0.2) -> fc2 -> LeakyReLU(0.2) -> final
# ---------------------------------------------------------------------------
def _leaky(z):
    return jnp.where(z >= 0, z, 0.2 * z)


def _mlp_head(h, w1_ref, b1_ref, w2_ref, b2_ref, wf_ref, bf_ref):
    h = _leaky(jnp.dot(h, w1_ref[...], preferred_element_type=jnp.float32)
               + b1_ref[...].astype(jnp.float32))
    h = _leaky(jnp.dot(h, w2_ref[...], preferred_element_type=jnp.float32)
               + b2_ref[...].astype(jnp.float32))
    return (jnp.dot(h, wf_ref[...], preferred_element_type=jnp.float32)
            + bf_ref[...].astype(jnp.float32))


# ---------------------------------------------------------------------------
# Path 1 (primary): DMA row gather.  Grid = (batch_tiles,).
#   ids       : scalar-prefetched flat int32 array in SMEM (drives the gather)
#   emb       : stays in HBM (memory_space=pl.ANY); per-token rows are DMA'd
#               into a double-buffered VMEM stage (rowbuf) and summed on the VPU.
# ---------------------------------------------------------------------------
def _dan_gather_kernel(nrows_ref, idsflat_ref,                 # scalar prefetch (SMEM)
                       ids_ref, emb_hbm,                       # inputs
                       w1_ref, b1_ref, w2_ref, b2_ref, wf_ref, bf_ref,
                       out_ref,                                # output
                       rowbuf, sem):                           # scratch
    b = pl.program_id(0)
    tb, seq = ids_ref.shape
    ep = rowbuf.shape[-1]
    base = b * (tb * seq)                  # flat offset of this batch tile's ids

    def issue(s, slot):
        # One small row-DMA per (row, token); all tb copies of a slot share one
        # DMA semaphore.
        for r in range(tb):
            tok = idsflat_ref[base + r * seq + s]
            pltpu.make_async_copy(
                emb_hbm.at[pl.ds(tok, 1), :],
                rowbuf.at[slot, pl.ds(r, 1), :],
                sem.at[slot],
            ).start()

    def wait(slot):
        # Wait with row-sized descriptors matching each issued copy.
        for r in range(tb):
            pltpu.make_async_copy(
                emb_hbm.at[pl.ds(0, 1), :],
                rowbuf.at[slot, pl.ds(r, 1), :],
                sem.at[slot],
            ).wait()

    issue(0, 0)
    acc = jnp.zeros((tb, ep), jnp.float32)
    # S and tb are small & static here, so the double-buffered gather loop is
    # fully unrolled.
    # TODO(synk): for long sequences / large batch tiles switch to pl.loop with a
    # dynamic slot instead of full unrolling.
    for s in range(seq):
        slot = s % 2
        wait(slot)
        if s + 1 < seq:
            issue(s + 1, 1 - slot)
        acc = acc + rowbuf[slot].astype(jnp.float32)

    ids = ids_ref[...]
    cnt = jnp.sum((ids != 0).astype(jnp.float32), axis=1, keepdims=True) + 1e-5
    row = lax.broadcasted_iota(jnp.int32, (tb, 1), 0) + b * tb
    valid = (row < nrows_ref[0]).astype(jnp.float32)   # mask padded batch rows
    h = (acc * valid) / cnt
    out_ref[...] = _mlp_head(h, w1_ref, b1_ref, w2_ref, b2_ref,
                             wf_ref, bf_ref).astype(out_ref.dtype)


@functools.partial(jax.jit, static_argnames=("n_tags", "batch_tile"))
def dan_forward_gather(ids, emb_p, w1_p, b1_p, w2_p, b2_p, wf_p, bf_p, *,
                       n_tags, batch_tile=16):
    """Gather-based DAN forward. Padded params come from pad_dan_params()."""
    B, S = ids.shape
    _, Ep = emb_p.shape
    Hp = w1_p.shape[1]
    Tp = wf_p.shape[1]

    # Keep the batch tile modest: each grid step issues tb*S small row-DMAs.
    # (On v7x, choose batch_tile so Bp // tb >= 2 to use both TensorCores.)
    tb = min(batch_tile, _round_up(B, 8))
    Bp = _round_up(B, tb)

    ids_p = jnp.zeros((Bp, S), jnp.int32).at[:B, :].set(ids.astype(jnp.int32))
    ids_flat = ids_p.reshape(-1)           # 1-D SMEM layout (cheap padding)
    nrows = jnp.array([B], jnp.int32)

    def const(shape):
        return pl.BlockSpec(shape, lambda b, nrows, idsf: (0, 0))

    out = pl.pallas_call(
        _dan_gather_kernel,
        out_shape=jax.ShapeDtypeStruct((Bp, Tp), jnp.float32),
        grid_spec=pltpu.PrefetchScalarGridSpec(
            num_scalar_prefetch=2,
            grid=(Bp // tb,),
            in_specs=[
                pl.BlockSpec((tb, S), lambda b, nrows, idsf: (b, 0)),  # ids (VMEM, for cnt)
                pl.BlockSpec(memory_space=pl.ANY),                     # emb stays in HBM
                const((Ep, Hp)), const((1, Hp)),                       # fc1
                const((Hp, Hp)), const((1, Hp)),                       # fc2
                const((Hp, Tp)), const((1, Tp)),                       # final
            ],
            out_specs=pl.BlockSpec((tb, Tp), lambda b, nrows, idsf: (b, 0)),
            scratch_shapes=[
                pltpu.VMEM((2, tb, Ep), emb_p.dtype),   # double-buffered row stage
                pltpu.SemaphoreType.DMA((2,)),          # one DMA sem per slot
            ],
        ),
        compiler_params=pltpu.CompilerParams(
            dimension_semantics=("parallel",),
            vmem_limit_bytes=48 * 1024 * 1024,
        ),
    )(nrows, ids_flat, ids_p, emb_p, w1_p, b1_p, w2_p, b2_p, wf_p, bf_p)

    return out[:B, :n_tags]


# ---------------------------------------------------------------------------
# Path 2 (tiny vocab only): bag-of-words matmul with the whole (small) table
# resident in VMEM.  Grid = (batch_tiles,) — the table is read exactly once.
# ---------------------------------------------------------------------------
def _dan_bow_kernel(nrows_ref,                                  # scalar prefetch (SMEM)
                    ids_ref, emb_ref,
                    w1_ref, b1_ref, w2_ref, b2_ref, wf_ref, bf_ref,
                    out_ref, *, vocab_strip):
    b = pl.program_id(0)
    tb, seq = ids_ref.shape
    vp, ep = emb_ref.shape
    ids = ids_ref[...]

    acc = jnp.zeros((tb, ep), jnp.float32)
    # 128-lane vocab strips bound the bow accumulator's vreg footprint.
    for v0 in range(0, vp, vocab_strip):
        vocab_ids = lax.broadcasted_iota(jnp.int32, (tb, vocab_strip), 1) + v0
        # int32 accumulation of boolean compares; cast to the matmul dtype once.
        bow = (ids[:, 0:1] == vocab_ids).astype(jnp.int32)
        for s in range(1, seq):
            bow = bow + (ids[:, s:s + 1] == vocab_ids).astype(jnp.int32)
        acc = acc + jnp.dot(bow.astype(emb_ref.dtype),
                            emb_ref[pl.ds(v0, vocab_strip), :],
                            preferred_element_type=jnp.float32)

    cnt = jnp.sum((ids != 0).astype(jnp.float32), axis=1, keepdims=True) + 1e-5
    row = lax.broadcasted_iota(jnp.int32, (tb, 1), 0) + b * tb
    valid = (row < nrows_ref[0]).astype(jnp.float32)   # mask padded batch rows
    h = (acc * valid) / cnt
    out_ref[...] = _mlp_head(h, w1_ref, b1_ref, w2_ref, b2_ref,
                             wf_ref, bf_ref).astype(out_ref.dtype)


@functools.partial(jax.jit, static_argnames=("n_tags", "batch_tile", "vocab_strip"))
def dan_forward_bow(ids, emb_p, w1_p, b1_p, w2_p, b2_p, wf_p, bf_p, *,
                    n_tags, batch_tile=256, vocab_strip=128):
    """BOW-based DAN forward for tiny vocabularies (whole table resident)."""
    B, S = ids.shape
    Vp, Ep = emb_p.shape
    Hp = w1_p.shape[1]
    Tp = wf_p.shape[1]

    tb = min(batch_tile, _round_up(B, 8))
    Bp = _round_up(B, tb)
    ids_p = jnp.zeros((Bp, S), jnp.int32).at[:B, :].set(ids.astype(jnp.int32))
    nrows = jnp.array([B], jnp.int32)

    strip = min(vocab_strip, Vp)
    if Vp % strip:
        strip = 128                        # Vp is padded to a multiple of 128

    kern = functools.partial(_dan_bow_kernel, vocab_strip=strip)

    def const(shape):
        return pl.BlockSpec(shape, lambda b, nrows: (0, 0))

    out = pl.pallas_call(
        kern,
        out_shape=jax.ShapeDtypeStruct((Bp, Tp), jnp.float32),
        grid_spec=pltpu.PrefetchScalarGridSpec(
            num_scalar_prefetch=1,
            grid=(Bp // tb,),
            in_specs=[
                pl.BlockSpec((tb, S), lambda b, nrows: (b, 0)),  # ids
                const((Vp, Ep)),                                 # whole (tiny) table
                const((Ep, Hp)), const((1, Hp)),                 # fc1
                const((Hp, Hp)), const((1, Hp)),                 # fc2
                const((Hp, Tp)), const((1, Tp)),                 # final
            ],
            out_specs=pl.BlockSpec((tb, Tp), lambda b, nrows: (b, 0)),
        ),
        compiler_params=pltpu.CompilerParams(
            dimension_semantics=("parallel",),
            vmem_limit_bytes=48 * 1024 * 1024,
        ),
    )(nrows, ids_p, emb_p, w1_p, b1_p, w2_p, b2_p, wf_p, bf_p)

    return out[:B, :n_tags]


# ---------------------------------------------------------------------------
# One-time parameter padding (hoisted out of the per-call forward path).
# ---------------------------------------------------------------------------
def pad_dan_params(emb, w1, b1, w2, b2, wf, bf, *, dtype=jnp.float32):
    """Zero-pad parameters to TPU-friendly (lane-dense) shapes ONCE.

    Use dtype=jnp.bfloat16 on v6e/v7x to halve HBM/VMEM traffic (accumulation in
    the kernels stays f32; expect ~1e-3 relative tolerance in that case).
    """
    V, E = emb.shape
    H = w1.shape[1]
    T = wf.shape[1]
    Ep, Hp, Tp = (_round_up(d, 128) for d in (E, H, T))
    Vp = _round_up(V, 128)

    def pad2(x, r, c):
        x = jnp.asarray(x).reshape(1, -1) if jnp.ndim(x) == 1 else jnp.asarray(x)
        return jnp.zeros((r, c), dtype).at[:x.shape[0], :x.shape[1]].set(x.astype(dtype))

    return (pad2(emb, Vp, Ep),
            pad2(w1, Ep, Hp), pad2(b1, 1, Hp),
            pad2(w2, Hp, Hp), pad2(b2, 1, Hp),
            pad2(wf, Hp, Tp), pad2(bf, 1, Tp))


def dan_forward(ids, padded_params, *, n_tags):
    """Dispatch: BOW kernel for tiny vocabularies, DMA row gather otherwise."""
    if padded_params[0].shape[0] <= 2048:
        return dan_forward_bow(ids, *padded_params, n_tags=n_tags)
    return dan_forward_gather(ids, *padded_params, n_tags=n_tags)


# ---------------------------------------------------------------------------
# Pure-JAX reference (HIGHEST precision so f32 matmuls match the Pallas kernels).
# ---------------------------------------------------------------------------
def ref_forward(ids, emb, w1, b1, w2, b2, wf, bf):
    hi = jax.lax.Precision.HIGHEST
    cnt = jnp.sum((ids != 0).astype(jnp.float32), axis=1, keepdims=True) + 1e-5
    h = jnp.sum(emb[ids], axis=1) / cnt
    h = jnp.where(h >= 0, h, h) if False else h  # (no-op; keep reference minimal)
    h = _leaky(jnp.dot(h, w1, precision=hi) + b1)
    h = _leaky(jnp.dot(h, w2, precision=hi) + b2)
    return jnp.dot(h, wf, precision=hi) + bf


if __name__ == "__main__":
    # Small synthetic config consistent with the module.
    B, S = 2, 8          # batch, seq_length
    V = 128              # vocab size
    E = 32               # args.emb_size
    H = 32               # args.hid_size
    T = 8                # tag_size

    key = jax.random.PRNGKey(0)
    ks = jax.random.split(key, 8)

    # Token ids (include some zeros so count_nonzero is non-trivial).
    ids = jax.random.randint(ks[0], (B, S), 0, V, dtype=jnp.int32)
    ids = ids.at[0, :3].set(0)

    # Uniform [-0.08, 0.08] init matching init_model_parameters() (this also
    # overwrites the padding row, exactly as torch does).
    def uni(k, shape):
        return jax.random.uniform(k, shape, jnp.float32, -0.08, 0.08)

    emb = uni(ks[1], (V, E))
    w1, b1 = uni(ks[2], (E, H)), uni(ks[3], (1, H))
    w2, b2 = uni(ks[4], (H, H)), uni(ks[5], (1, H))
    wf, bf = uni(ks[6], (H, T)), uni(ks[7], (1, T))

    params = pad_dan_params(emb, w1, b1, w2, b2, wf, bf)
    ref = ref_forward(ids, emb, w1, b1, w2, b2, wf, bf)

    # Exercise both paths (BOW for tiny vocab, DMA row gather for the general case).
    out_bow = jax.block_until_ready(dan_forward_bow(ids, *params, n_tags=T))
    out_gather = jax.block_until_ready(dan_forward_gather(ids, *params, n_tags=T))

    for name, out in (("bow", out_bow), ("gather", out_gather)):
        assert out.shape == (B, T), (name, out.shape)
        err = float(jnp.max(jnp.abs(out - ref)))
        assert err < 1e-4, (name, err)

    print("KERNEL_OK")
</pallas_src>

<mosaic_0001>
module attributes {stable_mosaic.version = 11 : i64} {
  func.func @_dan_bow_kernel(%arg0: i32, %arg1: memref<1xi32, #tpu.memory_space<smem>>, %arg2: memref<8x8xi32, #tpu.memory_space<vmem>>, %arg3: memref<128x128xf32, #tpu.memory_space<vmem>>, %arg4: memref<128x128xf32, #tpu.memory_space<vmem>>, %arg5: memref<1x128xf32, #tpu.memory_space<vmem>>, %arg6: memref<128x128xf32, #tpu.memory_space<vmem>>, %arg7: memref<1x128xf32, #tpu.memory_space<vmem>>, %arg8: memref<128x128xf32, #tpu.memory_space<vmem>>, %arg9: memref<1x128xf32, #tpu.memory_space<vmem>>, %arg10: memref<8x128xf32, #tpu.memory_space<vmem>>) attributes {dimension_semantics = [#tpu.dimension_semantics<parallel>], iteration_bounds = array<i64: 1>, scalar_prefetch = 1 : i64, scratch_operands = 0 : i64, tpu.core_type = #tpu.core_type<tc>, window_params = [{transform_indices = @transform_0, window_bounds = array<i64: 8, 8>}, {pipeline_mode = #tpu.pipeline_mode<synchronous>, transform_indices = @transform_1, window_bounds = array<i64: 128, 128>}, {pipeline_mode = #tpu.pipeline_mode<synchronous>, transform_indices = @transform_2, window_bounds = array<i64: 128, 128>}, {pipeline_mode = #tpu.pipeline_mode<synchronous>, transform_indices = @transform_3, window_bounds = array<i64: 1, 128>}, {pipeline_mode = #tpu.pipeline_mode<synchronous>, transform_indices = @transform_4, window_bounds = array<i64: 128, 128>}, {pipeline_mode = #tpu.pipeline_mode<synchronous>, transform_indices = @transform_5, window_bounds = array<i64: 1, 128>}, {pipeline_mode = #tpu.pipeline_mode<synchronous>, transform_indices = @transform_6, window_bounds = array<i64: 128, 128>}, {pipeline_mode = #tpu.pipeline_mode<synchronous>, transform_indices = @transform_7, window_bounds = array<i64: 1, 128>}, {transform_indices = @transform_8, window_bounds = array<i64: 8, 128>}]} {
    %c0 = arith.constant 0 : index
    %c0_0 = arith.constant 0 : index
    %0 = vector.load %arg2[%c0, %c0_0] : memref<8x8xi32, #tpu.memory_space<vmem>>, vector<8x8xi32>
    %cst = arith.constant 0.000000e+00 : f32
    %1 = vector.broadcast %cst : f32 to vector<8x128xf32>
    %2 = tpu.iota {dimensions = array<i32: 1>} : vector<8x128xi32>
    %c0_i32 = arith.constant 0 : i32
    %3 = vector.broadcast %c0_i32 : i32 to vector<8x128xi32>
    %4 = arith.addi %2, %3 : vector<8x128xi32>
    %5 = vector.extract_strided_slice %0 {offsets = [0, 0], sizes = [8, 1], strides = [1, 1]} : vector<8x8xi32> to vector<8x1xi32>
    %6 = vector.broadcast %5 : vector<8x1xi32> to vector<8x128xi32>
    %7 = arith.cmpi eq, %6, %4 : vector<8x128xi32>
    %8 = arith.extui %7 : vector<8x128xi1> to vector<8x128xi32>
    %9 = vector.extract_strided_slice %0 {offsets = [0, 1], sizes = [8, 1], strides = [1, 1]} : vector<8x8xi32> to vector<8x1xi32>
    %10 = vector.broadcast %9 : vector<8x1xi32> to vector<8x128xi32>
    %11 = arith.cmpi eq, %10, %4 : vector<8x128xi32>
    %12 = arith.extui %11 : vector<8x128xi1> to vector<8x128xi32>
    %13 = arith.addi %8, %12 : vector<8x128xi32>
    %14 = vector.extract_strided_slice %0 {offsets = [0, 2], sizes = [8, 1], strides = [1, 1]} : vector<8x8xi32> to vector<8x1xi32>
    %15 = vector.broadcast %14 : vector<8x1xi32> to vector<8x128xi32>
    %16 = arith.cmpi eq, %15, %4 : vector<8x128xi32>
    %17 = arith.extui %16 : vector<8x128xi1> to vector<8x128xi32>
    %18 = arith.addi %13, %17 : vector<8x128xi32>
    %19 = vector.extract_strided_slice %0 {offsets = [0, 3], sizes = [8, 1], strides = [1, 1]} : vector<8x8xi32> to vector<8x1xi32>
    %20 = vector.broadcast %19 : vector<8x1xi32> to vector<8x128xi32>
    %21 = arith.cmpi eq, %20, %4 : vector<8x128xi32>
    %22 = arith.extui %21 : vector<8x128xi1> to vector<8x128xi32>
    %23 = arith.addi %18, %22 : vector<8x128xi32>
    %24 = vector.extract_strided_slice %0 {offsets = [0, 4], sizes = [8, 1], strides = [1, 1]} : vector<8x8xi32> to vector<8x1xi32>
    %25 = vector.broadcast %24 : vector<8x1xi32> to vector<8x128xi32>
    %26 = arith.cmpi eq, %25, %4 : vector<8x128xi32>
    %27 = arith.extui %26 : vector<8x128xi1> to vector<8x128xi32>
    %28 = arith.addi %23, %27 : vector<8x128xi32>
    %29 = vector.extract_strided_slice %0 {offsets = [0, 5], sizes = [8, 1], strides = [1, 1]} : vector<8x8xi32> to vector<8x1xi32>
    %30 = vector.broadcast %29 : vector<8x1xi32> to vector<8x128xi32>
    %31 = arith.cmpi eq, %30, %4 : vector<8x128xi32>
    %32 = arith.extui %31 : vector<8x128xi1> to vector<8x128xi32>
    %33 = arith.addi %28, %32 : vector<8x128xi32>
    %34 = vector.extract_strided_slice %0 {offsets = [0, 6], sizes = [8, 1], strides = [1, 1]} : vector<8x8xi32> to vector<8x1xi32>
    %35 = vector.broadcast %34 : vector<8x1xi32> to vector<8x128xi32>
    %36 = arith.cmpi eq, %35, %4 : vector<8x128xi32>
    %37 = arith.extui %36 : vector<8x128xi1> to vector<8x128xi32>
    %38 = arith.addi %33, %37 : vector<8x128xi32>
    %39 = vector.extract_strided_slice %0 {offsets = [0, 7], sizes = [8, 1], strides = [1, 1]} : vector<8x8xi32> to vector<8x1xi32>
    %40 = vector.broadcast %39 : vector<8x1xi32> to vector<8x128xi32>
    %41 = arith.cmpi eq, %40, %4 : vector<8x128xi32>
    %42 = arith.extui %41 : vector<8x128xi1> to vector<8x128xi32>
    %43 = arith.addi %38, %42 : vector<8x128xi32>
    %44 = arith.sitofp %43 : vector<8x128xi32> to vector<8x128xf32>
    %c0_1 = arith.constant 0 : index
    %c0_2 = arith.constant 0 : index
    %45 = vector.load %arg3[%c0_1, %c0_2] : memref<128x128xf32, #tpu.memory_space<vmem>>, vector<128x128xf32>
    %cst_3 = arith.constant dense<0.000000e+00> : vector<8x128xf32>
    %46 = tpu.matmul %44, %45, %cst_3 {dimension_numbers = #tpu.dot_dimension_numbers<[1], [0], [0], [1], [0, 0, 1, 1], [], []>} : vector<8x128xf32>, vector<128x128xf32>, vector<8x128xf32> -> vector<8x128xf32>
    %47 = arith.addf %1, %46 : vector<8x128xf32>
    %c0_i32_4 = arith.constant 0 : i32
    %48 = vector.broadcast %c0_i32_4 : i32 to vector<8x8xi32>
    %49 = arith.cmpi ne, %0, %48 : vector<8x8xi32>
    %50 = arith.extui %49 : vector<8x8xi1> to vector<8x8xi32>
    %51 = arith.sitofp %50 : vector<8x8xi32> to vector<8x8xf32>
    %cst_5 = arith.constant dense<0.000000e+00> : vector<8xf32>
    %52 = vector.multi_reduction <add>, %51, %cst_5 [1] : vector<8x8xf32> to vector<8xf32>
    %53 = vector.shape_cast %52 : vector<8xf32> to vector<8x1xf32>
    %cst_6 = arith.constant 9.99999974E-6 : f32
    %54 = vector.broadcast %cst_6 : f32 to vector<8x1xf32>
    %55 = arith.addf %53, %54 : vector<8x1xf32>
    %56 = tpu.iota {dimensions = array<i32: 0>} : vector<8x1xi32>
    %c8_i32 = arith.constant 8 : i32
    %57 = arith.muli %arg0, %c8_i32 : i32
    %58 = vector.broadcast %57 : i32 to vector<8x1xi32>
    %59 = arith.addi %56, %58 : vector<8x1xi32>
    %c0_7 = arith.constant 0 : index
    %60 = memref.load %arg1[%c0_7] : memref<1xi32, #tpu.memory_space<smem>>
    %61 = vector.broadcast %60 : i32 to vector<8x1xi32>
    %62 = arith.cmpi slt, %59, %61 : vector<8x1xi32>
    %63 = arith.extui %62 : vector<8x1xi1> to vector<8x1xi32>
    %64 = arith.sitofp %63 : vector<8x1xi32> to vector<8x1xf32>
    %65 = vector.broadcast %64 : vector<8x1xf32> to vector<8x128xf32>
    %66 = arith.mulf %47, %65 : vector<8x128xf32>
    %67 = vector.broadcast %55 : vector<8x1xf32> to vector<8x128xf32>
    %68 = arith.divf %66, %67 : vector<8x128xf32>
    %c0_8 = arith.constant 0 : index
    %c0_9 = arith.constant 0 : index
    %69 = vector.load %arg4[%c0_8, %c0_9] : memref<128x128xf32, #tpu.memory_space<vmem>>, vector<128x128xf32>
    %cst_10 = arith.constant dense<0.000000e+00> : vector<8x128xf32>
    %70 = tpu.matmul %68, %69, %cst_10 {dimension_numbers = #tpu.dot_dimension_numbers<[1], [0], [0], [1], [0, 0, 1, 1], [], []>} : vector<8x128xf32>, vector<128x128xf32>, vector<8x128xf32> -> vector<8x128xf32>
    %c0_11 = arith.constant 0 : index
    %c0_12 = arith.constant 0 : index
    %71 = vector.load %arg5[%c0_11, %c0_12] : memref<1x128xf32, #tpu.memory_space<vmem>>, vector<1x128xf32>
    %72 = vector.broadcast %71 : vector<1x128xf32> to vector<8x128xf32>
    %73 = arith.addf %70, %72 : vector<8x128xf32>
    %cst_13 = arith.constant 0.000000e+00 : f32
    %74 = vector.broadcast %cst_13 : f32 to vector<8x128xf32>
    %75 = arith.cmpf oge, %73, %74 : vector<8x128xf32>
    %cst_14 = arith.constant 2.000000e-01 : f32
    %76 = vector.broadcast %cst_14 : f32 to vector<8x128xf32>
    %77 = arith.mulf %76, %73 : vector<8x128xf32>
    %78 = arith.select %75, %73, %77 : vector<8x128xi1>, vector<8x128xf32>
    %c0_15 = arith.constant 0 : index
    %c0_16 = arith.constant 0 : index
    %79 = vector.load %arg6[%c0_15, %c0_16] : memref<128x128xf32, #tpu.memory_space<vmem>>, vector<128x128xf32>
    %cst_17 = arith.constant dense<0.000000e+00> : vector<8x128xf32>
    %80 = tpu.matmul %78, %79, %cst_17 {dimension_numbers = #tpu.dot_dimension_numbers<[1], [0], [0], [1], [0, 0, 1, 1], [], []>} : vector<8x128xf32>, vector<128x128xf32>, vector<8x128xf32> -> vector<8x128xf32>
    %c0_18 = arith.constant 0 : index
    %c0_19 = arith.constant 0 : index
    %81 = vector.load %arg7[%c0_18, %c0_19] : memref<1x128xf32, #tpu.memory_space<vmem>>, vector<1x128xf32>
    %82 = vector.broadcast %81 : vector<1x128xf32> to vector<8x128xf32>
    %83 = arith.addf %80, %82 : vector<8x128xf32>
    %cst_20 = arith.constant 0.000000e+00 : f32
    %84 = vector.broadcast %cst_20 : f32 to vector<8x128xf32>
    %85 = arith.cmpf oge, %83, %84 : vector<8x128xf32>
    %cst_21 = arith.constant 2.000000e-01 : f32
    %86 = vector.broadcast %cst_21 : f32 to vector<8x128xf32>
    %87 = arith.mulf %86, %83 : vector<8x128xf32>
    %88 = arith.select %85, %83, %87 : vector<8x128xi1>, vector<8x128xf32>
    %c0_22 = arith.constant 0 : index
    %c0_23 = arith.constant 0 : index
    %89 = vector.load %arg8[%c0_22, %c0_23] : memref<128x128xf32, #tpu.memory_space<vmem>>, vector<128x128xf32>
    %cst_24 = arith.constant dense<0.000000e+00> : vector<8x128xf32>
    %90 = tpu.matmul %88, %89, %cst_24 {dimension_numbers = #tpu.dot_dimension_numbers<[1], [0], [0], [1], [0, 0, 1, 1], [], []>} : vector<8x128xf32>, vector<128x128xf32>, vector<8x128xf32> -> vector<8x128xf32>
    %c0_25 = arith.constant 0 : index
    %c0_26 = arith.constant 0 : index
    %91 = vector.load %arg9[%c0_25, %c0_26] : memref<1x128xf32, #tpu.memory_space<vmem>>, vector<1x128xf32>
    %92 = vector.broadcast %91 : vector<1x128xf32> to vector<8x128xf32>
    %93 = arith.addf %90, %92 : vector<8x128xf32>
    %c0_27 = arith.constant 0 : index
    %c0_28 = arith.constant 0 : index
    %94 = vector.load %arg10[%c0_27, %c0_28] : memref<8x128xf32, #tpu.memory_space<vmem>>, vector<8x128xf32>
    tpu.vector_store %arg10[%c0_27, %c0_28], %93 {strides = array<i32>} : memref<8x128xf32, #tpu.memory_space<vmem>>, vector<8x128xf32>,
    return
  }
  func.func @transform_0(%arg0: i32, %arg1: memref<1xi32, #tpu.memory_space<smem>>) -> (i32, i32) {
    %c0_i32 = arith.constant 0 : i32
    %c0_i32_0 = arith.constant 0 : i32
    return %arg0, %c0_i32 : i32, i32
  }
  func.func @transform_1(%arg0: i32, %arg1: memref<1xi32, #tpu.memory_space<smem>>) -> (i32, i32) {
    %c0_i32 = arith.constant 0 : i32
    %c0_i32_0 = arith.constant 0 : i32
    %c0_i32_1 = arith.constant 0 : i32
    return %c0_i32, %c0_i32_0 : i32, i32
  }
  func.func @transform_2(%arg0: i32, %arg1: memref<1xi32, #tpu.memory_space<smem>>) -> (i32, i32) {
    %c0_i32 = arith.constant 0 : i32
    %c0_i32_0 = arith.constant 0 : i32
    %c0_i32_1 = arith.constant 0 : i32
    return %c0_i32, %c0_i32_0 : i32, i32
  }
  func.func @transform_3(%arg0: i32, %arg1: memref<1xi32, #tpu.memory_space<smem>>) -> (i32, i32) {
    %c0_i32 = arith.constant 0 : i32
    %c0_i32_0 = arith.constant 0 : i32
    %c0_i32_1 = arith.constant 0 : i32
    return %c0_i32, %c0_i32_0 : i32, i32
  }
  func.func @transform_4(%arg0: i32, %arg1: memref<1xi32, #tpu.memory_space<smem>>) -> (i32, i32) {
    %c0_i32 = arith.constant 0 : i32
    %c0_i32_0 = arith.constant 0 : i32
    %c0_i32_1 = arith.constant 0 : i32
    return %c0_i32, %c0_i32_0 : i32, i32
  }
  func.func @transform_5(%arg0: i32, %arg1: memref<1xi32, #tpu.memory_space<smem>>) -> (i32, i32) {
    %c0_i32 = arith.constant 0 : i32
    %c0_i32_0 = arith.constant 0 : i32
    %c0_i32_1 = arith.constant 0 : i32
    return %c0_i32, %c0_i32_0 : i32, i32
  }
  func.func @transform_6(%arg0: i32, %arg1: memref<1xi32, #tpu.memory_space<smem>>) -> (i32, i32) {
    %c0_i32 = arith.constant 0 : i32
    %c0_i32_0 = arith.constant 0 : i32
    %c0_i32_1 = arith.constant 0 : i32
    return %c0_i32, %c0_i32_0 : i32, i32
  }
  func.func @transform_7(%arg0: i32, %arg1: memref<1xi32, #tpu.memory_space<smem>>) -> (i32, i32) {
    %c0_i32 = arith.constant 0 : i32
    %c0_i32_0 = arith.constant 0 : i32
    %c0_i32_1 = arith.constant 0 : i32
    return %c0_i32, %c0_i32_0 : i32, i32
  }
  func.func @transform_8(%arg0: i32, %arg1: memref<1xi32, #tpu.memory_space<smem>>) -> (i32, i32) {
    %c0_i32 = arith.constant 0 : i32
    %c0_i32_0 = arith.constant 0 : i32
    return %arg0, %c0_i32 : i32, i32
  }
}

</mosaic_0001>

<llo_original>
// kernel: dan_forward_bow.1
$region0: #{dan_forward_bow.1}
  #allocation0 [shape = 'u32[]', space=smem, size = 0x4, offset = 0x4, fixed_abs, tag = 'smem constant byte address 0x4 - core index']
  #allocation1 [shape = 'u32[144,128]{1,0:T(1,128)}', space=vmem, size = 0x12000, scoped, tag = 'internal scratch']
  #allocation2 [shape = 's32[1]{0}', space=sflag, size = 0x4, scoped, tag = 'scoped memory for dan_forward_bow.1']
  #allocation3 [shape = 's32[1]{0:T(128)S(6)}', space=smem, size = 0x200, scoped, tag = 'prefetched SMEM operand 0']
  %s0 = inlined_call_operand.<no memory space> [shape: s32[1], index: 0, kind: input, shape index: {}]
  %s1 = inlined_call_operand.vmem [shape: s32[8,8], index: 1, kind: input, shape index: {}]
  %s2 = inlined_call_operand.hbm [shape: f32[128,128], index: 2, kind: input, shape index: {}]
  %s3 = inlined_call_operand.hbm [shape: f32[128,128], index: 3, kind: input, shape index: {}]
  %s4 = inlined_call_operand.vmem [shape: f32[1,128], index: 4, kind: input, shape index: {}]
  %s5 = inlined_call_operand.hbm [shape: f32[128,128], index: 5, kind: input, shape index: {}]
  %s6 = inlined_call_operand.vmem [shape: f32[1,128], index: 6, kind: input, shape index: {}]
  %s7 = inlined_call_operand.hbm [shape: f32[128,128], index: 7, kind: input, shape index: {}]
  %s8 = inlined_call_operand.vmem [shape: f32[1,128], index: 8, kind: input, shape index: {}]
  %s9 = inlined_call_operand.vmem [shape: f32[8,128], index: 9, kind: output, shape index: {}]
  %s10 = sld [smem:[#allocation0]]
  $region58: #{dan_forward_bow.1} parent=0
    _
  %s12 = ssub.s32 1, %s10
  %s13 = scalar_select 0, %s12, %s10
  %14 = sst [smem:[#allocation3]] %s0
  $region1: #{dan_forward_bow.1} parent=0
    #allocation4 [shape = 'u8[65536]{0}', space=vmem, size = 0x10000, scoped, tag = 'input window, operand 2, single buffered']
    #allocation5 [shape = 's32[1]{0}', space=sflag, size = 0x4, scoped, tag = 'scoped memory for dan_forward_bow.1']
    #allocation6 [shape = 'u8[65536]{0}', space=vmem, size = 0x10000, scoped, tag = 'input window, operand 3, single buffered']
    #allocation7 [shape = 's32[1]{0}', space=sflag, size = 0x4, scoped, tag = 'scoped memory for dan_forward_bow.1']
    #allocation8 [shape = 'u8[65536]{0}', space=vmem, size = 0x10000, scoped, tag = 'input window, operand 5, single buffered']
    #allocation9 [shape = 'u8[65536]{0}', space=vmem, size = 0x10000, scoped, tag = 'input window, operand 7, single buffered']
    #allocation10 [shape = 's32[1]{0}', space=sflag, size = 0x4, scoped, tag = 'scoped memory for dan_forward_bow.1']
    %15 = vsyncpa [#allocation5], 0
    %16 = vsyncpa [#allocation7], 0
    %17 = vsyncpa [#allocation10], 0
    // Predicated region
    $region2: #{dan_forward_bow.1} parent=1 // pred_check
      _
    $region3: #{dan_forward_bow.1} parent=1 // pred_check_branch
      %19 = sbr.rel (0) target = $region5
    $region4: #{dan_forward_bow.1} parent=1 // pred_region
      _
    $region5: #{dan_forward_bow.1} parent=1 // pred_fallthru
      _
    // Predicated region
    $region6: #{dan_forward_bow.1} parent=1 // pred_check
      _
    $region7: #{dan_forward_bow.1} parent=1 // pred_check_branch
      %21 = sbr.rel (0) target = $region9
    $region8: #{dan_forward_bow.1} parent=1 // pred_region
      %s23 = ssub.s32 2048, 2048
      %24 = vsyncadd [#allocation5], %s23
      %s25 = sshll.u32 [#allocation4], 4
      %s26 = int_to_ptr.vmem [resolvable:$true] %s25
      %31 = dma.hbm_to_vmem [thread:$0]  %s2, 2048, %s26, [#allocation5], 128, 128, 8
    $region9: #{dan_forward_bow.1} parent=1 // pred_fallthru
      _
    // Predicated region
    $region10: #{dan_forward_bow.1} parent=1 // pred_check
      _
    $region11: #{dan_forward_bow.1} parent=1 // pred_check_branch
      %33 = sbr.rel (0) target = $region13
    $region12: #{dan_forward_bow.1} parent=1 // pred_region
      %s35 = ssub.s32 2048, 2048
      %36 = vsyncadd [#allocation7], %s35
      %s37 = sshll.u32 [#allocation6], 4
      %s38 = int_to_ptr.vmem [resolvable:$true] %s37
      %43 = dma.hbm_to_vmem [thread:$0]  %s3, 2048, %s38, [#allocation7], 128, 128, 8
    $region13: #{dan_forward_bow.1} parent=1 // pred_fallthru
      _
    // Predicated region
    $region14: #{dan_forward_bow.1} parent=1 // pred_check
      _
    $region15: #{dan_forward_bow.1} parent=1 // pred_check_branch
      %45 = sbr.rel (0) target = $region17
    $region16: #{dan_forward_bow.1} parent=1 // pred_region
      _
    $region17: #{dan_forward_bow.1} parent=1 // pred_fallthru
      _
    // Predicated region
    $region18: #{dan_forward_bow.1} parent=1 // pred_check
      _
    $region19: #{dan_forward_bow.1} parent=1 // pred_check_branch
      %47 = sbr.rel (0) target = $region21
    $region20: #{dan_forward_bow.1} parent=1 // pred_region
      %s49 = ssub.s32 2048, 2048
      %50 = vsyncadd [#allocation7], %s49
      %s51 = sshll.u32 [#allocation8], 4
      %s52 = int_to_ptr.vmem [resolvable:$true] %s51
      %57 = dma.hbm_to_vmem [thread:$0]  %s5, 2048, %s52, [#allocation7], 128, 128, 8
    $region21: #{dan_forward_bow.1} parent=1 // pred_fallthru
      _
    // Predicated region
    $region22: #{dan_forward_bow.1} parent=1 // pred_check
      _
    $region23: #{dan_forward_bow.1} parent=1 // pred_check_branch
      %59 = sbr.rel (0) target = $region25
    $region24: #{dan_forward_bow.1} parent=1 // pred_region
      _
    $region25: #{dan_forward_bow.1} parent=1 // pred_fallthru
      _
    // Predicated region
    $region26: #{dan_forward_bow.1} parent=1 // pred_check
      _
    $region27: #{dan_forward_bow.1} parent=1 // pred_check_branch
      %61 = sbr.rel (0) target = $region29
    $region28: #{dan_forward_bow.1} parent=1 // pred_region
      %s63 = ssub.s32 2048, 2048
      %64 = vsyncadd [#allocation10], %s63
      %s65 = sshll.u32 [#allocation9], 4
      %s66 = int_to_ptr.vmem [resolvable:$true] %s65
      %71 = dma.hbm_to_vmem [thread:$0]  %s7, 2048, %s66, [#allocation10], 128, 128, 8
    $region29: #{dan_forward_bow.1} parent=1 // pred_fallthru
      _
    // Predicated region
    $region30: #{dan_forward_bow.1} parent=1 // pred_check
      _
    $region31: #{dan_forward_bow.1} parent=1 // pred_check_branch
      %73 = sbr.rel (0) target = $region33
    $region32: #{dan_forward_bow.1} parent=1 // pred_region
      _
    $region33: #{dan_forward_bow.1} parent=1 // pred_fallthru
      _
    // Predicated region
    $region34: #{dan_forward_bow.1} parent=1 // pred_check
      _
    $region35: #{dan_forward_bow.1} parent=1 // pred_check_branch
      %75 = sbr.rel (0) target = $region37
    $region36: #{dan_forward_bow.1} parent=1 // pred_region
      %76 = dma.done [#allocation5], 2048
    $region37: #{dan_forward_bow.1} parent=1 // pred_fallthru
      _
    // Predicated region
    $region38: #{dan_forward_bow.1} parent=1 // pred_check
      _
    $region39: #{dan_forward_bow.1} parent=1 // pred_check_branch
      %78 = sbr.rel (0) target = $region41
    $region40: #{dan_forward_bow.1} parent=1 // pred_region
      %79 = dma.done [#allocation7], 2048
    $region41: #{dan_forward_bow.1} parent=1 // pred_fallthru
      _
    // Predicated region
    $region42: #{dan_forward_bow.1} parent=1 // pred_check
      _
    $region43: #{dan_forward_bow.1} parent=1 // pred_check_branch
      %81 = sbr.rel (0) target = $region45
    $region44: #{dan_forward_bow.1} parent=1 // pred_region
      %82 = dma.done [#allocation7], 2048
    $region45: #{dan_forward_bow.1} parent=1 // pred_fallthru
      _
    // Predicated region
    $region46: #{dan_forward_bow.1} parent=1 // pred_check
      _
    $region47: #{dan_forward_bow.1} parent=1 // pred_check_branch
      %84 = sbr.rel (0) target = $region49
    $region48: #{dan_forward_bow.1} parent=1 // pred_region
      %85 = dma.done [#allocation10], 2048
    $region49: #{dan_forward_bow.1} parent=1 // pred_fallthru
      _
    %v86 = vld [vmem:[%s1] sm:$0xff]
    %v87 = vlaneseq
    %v88 = vand.u32 %v87, 127
    %89 = vset.pattern.permute.xlu0 0
    %90 = vperm.xlu0 %89, %v86
    %v91 = vpop.permute.xlu0 %90
    %vm92 = vcmp.eq.s32.totalorder %v91, %v88
    %v93 = vsel %vm92, 1, 0
    %94 = vset.pattern.permute.xlu0 1
    %95 = vperm.xlu0 %94, %v86
    %v96 = vpop.permute.xlu0 %95
    %vm97 = vcmp.eq.s32.totalorder %v96, %v88
    %v98 = vsel %vm97, 1, 0
    %v99 = vadd.s32 %v93, %v98
    %100 = vset.pattern.permute.xlu0 2
    %101 = vperm.xlu0 %100, %v86
    %v102 = vpop.permute.xlu0 %101
    %vm103 = vcmp.eq.s32.totalorder %v102, %v88
    %v104 = vsel %vm103, 1, 0
    %v105 = vadd.s32 %v99, %v104
    %106 = vset.pattern.permute.xlu0 3
    %107 = vperm.xlu0 %106, %v86
    %v108 = vpop.permute.xlu0 %107
    %vm109 = vcmp.eq.s32.totalorder %v108, %v88
    %v110 = vsel %vm109, 1, 0
    %v111 = vadd.s32 %v105, %v110
    %112 = vset.pattern.permute.xlu0 4
    %113 = vperm.xlu0 %112, %v86
    %v114 = vpop.permute.xlu0 %113
    %vm115 = vcmp.eq.s32.totalorder %v114, %v88
    %v116 = vsel %vm115, 1, 0
    %v117 = vadd.s32 %v111, %v116
    %118 = vset.pattern.permute.xlu0 5
    %119 = vperm.xlu0 %118, %v86
    %v120 = vpop.permute.xlu0 %119
    %vm121 = vcmp.eq.s32.totalorder %v120, %v88
    %v122 = vsel %vm121, 1, 0
    %v123 = vadd.s32 %v117, %v122
    %124 = vset.pattern.permute.xlu0 6
    %125 = vperm.xlu0 %124, %v86
    %v126 = vpop.permute.xlu0 %125
    %vm127 = vcmp.eq.s32.totalorder %v126, %v88
    %v128 = vsel %vm127, 1, 0
    %v129 = vadd.s32 %v123, %v128
    %130 = vset.pattern.permute.xlu0 7
    %131 = vperm.xlu0 %130, %v86
    %v132 = vpop.permute.xlu0 %131
    %vm133 = vcmp.eq.s32.totalorder %v132, %v88
    %v134 = vsel %vm133, 1, 0
    %v135 = vadd.s32 %v129, %v134
    %v136 = vcvt.s32.f32 %v135
    %v137 = vld [vmem:[#allocation4] sm:$0xff]
    %v138 = vld [vmem:[#allocation4 + $0x8] sm:$0xff]
    %v139 = vld [vmem:[#allocation4 + $0x10] sm:$0xff]
    %v140 = vld [vmem:[#allocation4 + $0x18] sm:$0xff]
    %v141 = vld [vmem:[#allocation4 + $0x20] sm:$0xff]
    %v142 = vld [vmem:[#allocation4 + $0x28] sm:$0xff]
    %v143 = vld [vmem:[#allocation4 + $0x30] sm:$0xff]
    %v144 = vld [vmem:[#allocation4 + $0x38] sm:$0xff]
    %v145 = vld [vmem:[#allocation4 + $0x40] sm:$0xff]
    %v146 = vld [vmem:[#allocation4 + $0x48] sm:$0xff]
    %v147 = vld [vmem:[#allocation4 + $0x50] sm:$0xff]
    %v148 = vld [vmem:[#allocation4 + $0x58] sm:$0xff]
    %v149 = vld [vmem:[#allocation4 + $0x60] sm:$0xff]
    %v150 = vld [vmem:[#allocation4 + $0x68] sm:$0xff]
    %v151 = vld [vmem:[#allocation4 + $0x70] sm:$0xff]
    %v152 = vld [vmem:[#allocation4 + $0x78] sm:$0xff]
    %153 = vmatprep.subr.mxu0 0.0
    %154 = vmatpush1.msra.mxu0 %v152
    %155 = vmatprep.subr.mxu0 0.0
    %156 = vmatpush1.msra.mxu0 %v151
    %157 = vmatprep.subr.mxu0 0.0
    %158 = vmatpush1.msra.mxu0 %v150
    %159 = vmatprep.subr.mxu0 0.0
    %160 = vmatpush1.msra.mxu0 %v149
    %161 = vmatprep.subr.mxu0 0.0
    %162 = vmatpush1.msra.mxu0 %v148
    %163 = vmatprep.subr.mxu0 0.0
    %164 = vmatpush1.msra.mxu0 %v147
    %165 = vmatprep.subr.mxu0 0.0
    %166 = vmatpush1.msra.mxu0 %v146
    %167 = vmatprep.subr.mxu0 0.0
    %168 = vmatpush1.msra.mxu0 %v145
    %169 = vmatprep.subr.mxu0 0.0
    %170 = vmatpush1.msra.mxu0 %v144
    %171 = vmatprep.subr.mxu0 0.0
    %172 = vmatpush1.msra.mxu0 %v143
    %173 = vmatprep.subr.mxu0 0.0
    %174 = vmatpush1.msra.mxu0 %v142
    %175 = vmatprep.subr.mxu0 0.0
    %176 = vmatpush1.msra.mxu0 %v141
    %177 = vmatprep.subr.mxu0 0.0
    %178 = vmatpush1.msra.mxu0 %v140
    %179 = vmatprep.subr.mxu0 0.0
    %180 = vmatpush1.msra.mxu0 %v139
    %181 = vmatprep.subr.mxu0 0.0
    %182 = vmatpush1.msra.mxu0 %v138
    %183 = vmatprep.subr.mxu0 0.0
    %184 = vmatpush1.msra.mxu0 %v137
    %185 = vmatprep.subr.mxu0 0.0
    %186 = vmatpush2.msra.mxu0 0.0
    %187 = vmatprep.subr.mxu0 0.0
    %188 = vmatpush2.msra.mxu0 0.0
    %189 = vmatprep.subr.mxu0 0.0
    %190 = vmatpush2.msra.mxu0 0.0
    %191 = vmatprep.subr.mxu0 0.0
    %192 = vmatpush2.msra.mxu0 0.0
    %193 = vmatprep.subr.mxu0 0.0
    %194 = vmatpush2.msra.mxu0 0.0
    %195 = vmatprep.subr.mxu0 0.0
    %196 = vmatpush2.msra.mxu0 0.0
    %197 = vmatprep.subr.mxu0 0.0
    %198 = vmatpush2.msra.mxu0 0.0
    %199 = vmatprep.subr.mxu0 0.0
    %200 = vmatpush2.msra.mxu0 0.0
    %201 = vmatprep.subr.mxu0 0.0
    %202 = vmatpush2.msra.mxu0 0.0
    %203 = vmatprep.subr.mxu0 0.0
    %204 = vmatpush2.msra.mxu0 0.0
    %205 = vmatprep.subr.mxu0 0.0
    %206 = vmatpush2.msra.mxu0 0.0
    %207 = vmatprep.subr.mxu0 0.0
    %208 = vmatpush2.msra.mxu0 0.0
    %209 = vmatprep.subr.mxu0 0.0
    %210 = vmatpush2.msra.mxu0 0.0
    %211 = vmatprep.subr.mxu0 0.0
    %212 = vmatpush2.msra.mxu0 0.0
    %213 = vmatprep.subr.mxu0 0.0
    %214 = vmatpush2.msra.mxu0 0.0
    %215 = vmatprep.subr.mxu0 0.0
    %216 = vmatpush2.msra.mxu0 0.0
    %217 = vmatprep.mubr.f32.mxu0 0.0
    %218 = vmatmul.mubr.f32.gmra.mxu0 %v136
    %v219 = vpop.f32.mrf.mxu0
    %v220 = vadd.f32 0.0, %v219
    %v221 = vpop.f32.mrf.mxu0
    %222 = vdwg.mxu0
    %vm223 = vcmp.ne.s32.totalorder %v86, 0
    %v224 = vsel %vm223, 1, 0
    %v225 = vcvt.s32.f32 %v224
    %vm226 = vcmask 64512
    %v227 = vsel %vm226, %v225, 0.0
    %228 = vadd.xlane.f32.xlu0 %v227
    %v229 = vpop.xlane.xlu0 %228
    %v230 = vadd.f32 %v229, 1e-05
    %v231 = vlaneseq
    %v232 = vshrl.u32 %v231, 7
    %s233 = smul.u32 0, 8
    %v234 = vstv %s233
    %v235 = vadd.s32 %v232, %v234
    %s236 = sld [smem:[#allocation3]]
    %v237 = vstv %s236
    %vm238 = vcmp.lt.s32.totalorder %v235, %v237
    %v239 = vsel %vm238, 1, 0
    %v240 = vcvt.s32.f32 %v239
    %v241 = vmul.f32 %v220, %v240
    %v242 = vrcp.pop %v230
    %v243 = vmul.f32 %v241, %v242
    %v244 = vld [vmem:[#allocation6] sm:$0xff]
    %v245 = vld [vmem:[#allocation6 + $0x8] sm:$0xff]
    %v246 = vld [vmem:[#allocation6 + $0x10] sm:$0xff]
    %v247 = vld [vmem:[#allocation6 + $0x18] sm:$0xff]
    %v248 = vld [vmem:[#allocation6 + $0x20] sm:$0xff]
    %v249 = vld [vmem:[#allocation6 + $0x28] sm:$0xff]
    %v250 = vld [vmem:[#allocation6 + $0x30] sm:$0xff]
    %v251 = vld [vmem:[#allocation6 + $0x38] sm:$0xff]
    %v252 = vld [vmem:[#allocation6 + $0x40] sm:$0xff]
    %v253 = vld [vmem:[#allocation6 + $0x48] sm:$0xff]
    %v254 = vld [vmem:[#allocation6 + $0x50] sm:$0xff]
    %v255 = vld [vmem:[#allocation6 + $0x58] sm:$0xff]
    %v256 = vld [vmem:[#allocation6 + $0x60] sm:$0xff]
    %v257 = vld [vmem:[#allocation6 + $0x68] sm:$0xff]
    %v258 = vld [vmem:[#allocation6 + $0x70] sm:$0xff]
    %v259 = vld [vmem:[#allocation6 + $0x78] sm:$0xff]
    %v260 = vld [vmem:[%s4] sm:$0x1]
    %v262 = vlaneseq
    %v263 = vshrl.u32 %v262, 7
    %v264 = vsub.s32 0, %v263
    %v265 = vrot.slane %v260, %v264
    %267 = vmatprep.subr.mxu0 0.0
    %268 = vmatpush1.msra.mxu0 %v259
    %269 = vmatprep.subr.mxu0 0.0
    %270 = vmatpush1.msra.mxu0 %v258
    %271 = vmatprep.subr.mxu0 0.0
    %272 = vmatpush1.msra.mxu0 %v257
    %273 = vmatprep.subr.mxu0 0.0
    %274 = vmatpush1.msra.mxu0 %v256
    %275 = vmatprep.subr.mxu0 0.0
    %276 = vmatpush1.msra.mxu0 %v255
    %277 = vmatprep.subr.mxu0 0.0
    %278 = vmatpush1.msra.mxu0 %v254
    %279 = vmatprep.subr.mxu0 0.0
    %280 = vmatpush1.msra.mxu0 %v253
    %281 = vmatprep.subr.mxu0 0.0
    %282 = vmatpush1.msra.mxu0 %v252
    %283 = vmatprep.subr.mxu0 0.0
    %284 = vmatpush1.msra.mxu0 %v251
    %285 = vmatprep.subr.mxu0 0.0
    %286 = vmatpush1.msra.mxu0 %v250
    %287 = vmatprep.subr.mxu0 0.0
    %288 = vmatpush1.msra.mxu0 %v249
    %289 = vmatprep.subr.mxu0 0.0
    %290 = vmatpush1.msra.mxu0 %v248
    %291 = vmatprep.subr.mxu0 0.0
    %292 = vmatpush1.msra.mxu0 %v247
    %293 = vmatprep.subr.mxu0 0.0
    %294 = vmatpush1.msra.mxu0 %v246
    %295 = vmatprep.subr.mxu0 0.0
    %296 = vmatpush1.msra.mxu0 %v245
    %297 = vmatprep.subr.mxu0 0.0
    %298 = vmatpush1.msra.mxu0 %v244
    %299 = vmatprep.subr.mxu0 0.0
    %300 = vmatpush2.msra.mxu0 0.0
    %301 = vmatprep.subr.mxu0 0.0
    %302 = vmatpush2.msra.mxu0 0.0
    %303 = vmatprep.subr.mxu0 0.0
    %304 = vmatpush2.msra.mxu0 0.0
    %305 = vmatprep.subr.mxu0 0.0
    %306 = vmatpush2.msra.mxu0 0.0
    %307 = vmatprep.subr.mxu0 0.0
    %308 = vmatpush2.msra.mxu0 0.0
    %309 = vmatprep.subr.mxu0 0.0
    %310 = vmatpush2.msra.mxu0 0.0
    %311 = vmatprep.subr.mxu0 0.0
    %312 = vmatpush2.msra.mxu0 0.0
    %313 = vmatprep.subr.mxu0 0.0
    %314 = vmatpush2.msra.mxu0 0.0
    %315 = vmatprep.subr.mxu0 0.0
    %316 = vmatpush2.msra.mxu0 0.0
    %317 = vmatprep.subr.mxu0 0.0
    %318 = vmatpush2.msra.mxu0 0.0
    %319 = vmatprep.subr.mxu0 0.0
    %320 = vmatpush2.msra.mxu0 0.0
    %321 = vmatprep.subr.mxu0 0.0
    %322 = vmatpush2.msra.mxu0 0.0
    %323 = vmatprep.subr.mxu0 0.0
    %324 = vmatpush2.msra.mxu0 0.0
    %325 = vmatprep.subr.mxu0 0.0
    %326 = vmatpush2.msra.mxu0 0.0
    %327 = vmatprep.subr.mxu0 0.0
    %328 = vmatpush2.msra.mxu0 0.0
    %329 = vmatprep.subr.mxu0 0.0
    %330 = vmatpush2.msra.mxu0 0.0
    %331 = vmatprep.mubr.f32.mxu0 0.0
    %332 = vmatmul.mubr.f32.gmra.mxu0 %v243
    %v333 = vpop.f32.mrf.mxu0
    %v334 = vadd.f32 %v265, %v333
    %v335 = vpop.f32.mrf.mxu0
    %336 = vdwg.mxu0
    %vm337 = vcmp.ge.f32.partialorder %v334, 0.0
    %v338 = vmul.f32 %v334, 0.2
    %v339 = vsel %vm337, %v334, %v338
    %v340 = vld [vmem:[#allocation8] sm:$0xff]
    %v341 = vld [vmem:[#allocation8 + $0x8] sm:$0xff]
    %v342 = vld [vmem:[#allocation8 + $0x10] sm:$0xff]
    %v343 = vld [vmem:[#allocation8 + $0x18] sm:$0xff]
    %v344 = vld [vmem:[#allocation8 + $0x20] sm:$0xff]
    %v345 = vld [vmem:[#allocation8 + $0x28] sm:$0xff]
    %v346 = vld [vmem:[#allocation8 + $0x30] sm:$0xff]
    %v347 = vld [vmem:[#allocation8 + $0x38] sm:$0xff]
    %v348 = vld [vmem:[#allocation8 + $0x40] sm:$0xff]
    %v349 = vld [vmem:[#allocation8 + $0x48] sm:$0xff]
    %v350 = vld [vmem:[#allocation8 + $0x50] sm:$0xff]
    %v351 = vld [vmem:[#allocation8 + $0x58] sm:$0xff]
    %v352 = vld [vmem:[#allocation8 + $0x60] sm:$0xff]
    %v353 = vld [vmem:[#allocation8 + $0x68] sm:$0xff]
    %v354 = vld [vmem:[#allocation8 + $0x70] sm:$0xff]
    %v355 = vld [vmem:[#allocation8 + $0x78] sm:$0xff]
    %v356 = vld [vmem:[%s6] sm:$0x1]
    %v358 = vlaneseq
    %v359 = vshrl.u32 %v358, 7
    %v360 = vsub.s32 0, %v359
    %v361 = vrot.slane %v356, %v360
    %363 = vmatprep.subr.mxu0 0.0
    %364 = vmatpush1.msra.mxu0 %v355
    %365 = vmatprep.subr.mxu0 0.0
    %366 = vmatpush1.msra.mxu0 %v354
    %367 = vmatprep.subr.mxu0 0.0
    %368 = vmatpush1.msra.mxu0 %v353
    %369 = vmatprep.subr.mxu0 0.0
    %370 = vmatpush1.msra.mxu0 %v352
    %371 = vmatprep.subr.mxu0 0.0
    %372 = vmatpush1.msra.mxu0 %v351
    %373 = vmatprep.subr.mxu0 0.0
    %374 = vmatpush1.msra.mxu0 %v350
    %375 = vmatprep.subr.mxu0 0.0
    %376 = vmatpush1.msra.mxu0 %v349
    %377 = vmatprep.subr.mxu0 0.0
    %378 = vmatpush1.msra.mxu0 %v348
    %379 = vmatprep.subr.mxu0 0.0
    %380 = vmatpush1.msra.mxu0 %v347
    %381 = vmatprep.subr.mxu0 0.0
    %382 = vmatpush1.msra.mxu0 %v346
    %383 = vmatprep.subr.mxu0 0.0
    %384 = vmatpush1.msra.mxu0 %v345
    %385 = vmatprep.subr.mxu0 0.0
    %386 = vmatpush1.msra.mxu0 %v344
    %387 = vmatprep.subr.mxu0 0.0
    %388 = vmatpush1.msra.mxu0 %v343
    %389 = vmatprep.subr.mxu0 0.0
    %390 = vmatpush1.msra.mxu0 %v342
    %391 = vmatprep.subr.mxu0 0.0
    %392 = vmatpush1.msra.mxu0 %v341
    %393 = vmatprep.subr.mxu0 0.0
    %394 = vmatpush1.msra.mxu0 %v340
    %395 = vmatprep.subr.mxu0 0.0
    %396 = vmatpush2.msra.mxu0 0.0
    %397 = vmatprep.subr.mxu0 0.0
    %398 = vmatpush2.msra.mxu0 0.0
    %399 = vmatprep.subr.mxu0 0.0
    %400 = vmatpush2.msra.mxu0 0.0
    %401 = vmatprep.subr.mxu0 0.0
    %402 = vmatpush2.msra.mxu0 0.0
    %403 = vmatprep.subr.mxu0 0.0
    %404 = vmatpush2.msra.mxu0 0.0
    %405 = vmatprep.subr.mxu0 0.0
    %406 = vmatpush2.msra.mxu0 0.0
    %407 = vmatprep.subr.mxu0 0.0
    %408 = vmatpush2.msra.mxu0 0.0
    %409 = vmatprep.subr.mxu0 0.0
    %410 = vmatpush2.msra.mxu0 0.0
    %411 = vmatprep.subr.mxu0 0.0
    %412 = vmatpush2.msra.mxu0 0.0
    %413 = vmatprep.subr.mxu0 0.0
    %414 = vmatpush2.msra.mxu0 0.0
    %415 = vmatprep.subr.mxu0 0.0
    %416 = vmatpush2.msra.mxu0 0.0
    %417 = vmatprep.subr.mxu0 0.0
    %418 = vmatpush2.msra.mxu0 0.0
    %419 = vmatprep.subr.mxu0 0.0
    %420 = vmatpush2.msra.mxu0 0.0
    %421 = vmatprep.subr.mxu0 0.0
    %422 = vmatpush2.msra.mxu0 0.0
    %423 = vmatprep.subr.mxu0 0.0
    %424 = vmatpush2.msra.mxu0 0.0
    %425 = vmatprep.subr.mxu0 0.0
    %426 = vmatpush2.msra.mxu0 0.0
    %427 = vmatprep.mubr.f32.mxu0 0.0
    %428 = vmatmul.mubr.f32.gmra.mxu0 %v339
    %v429 = vpop.f32.mrf.mxu0
    %v430 = vadd.f32 %v361, %v429
    %v431 = vpop.f32.mrf.mxu0
    %432 = vdwg.mxu0
    %vm433 = vcmp.ge.f32.partialorder %v430, 0.0
    %v434 = vmul.f32 %v430, 0.2
    %v435 = vsel %vm433, %v430, %v434
    %v436 = vld [vmem:[#allocation9] sm:$0xff]
    %v437 = vld [vmem:[#allocation9 + $0x8] sm:$0xff]
    %v438 = vld [vmem:[#allocation9 + $0x10] sm:$0xff]
    %v439 = vld [vmem:[#allocation9 + $0x18] sm:$0xff]
    %v440 = vld [vmem:[#allocation9 + $0x20] sm:$0xff]
    %v441 = vld [vmem:[#allocation9 + $0x28] sm:$0xff]
    %v442 = vld [vmem:[#allocation9 + $0x30] sm:$0xff]
    %v443 = vld [vmem:[#allocation9 + $0x38] sm:$0xff]
    %v444 = vld [vmem:[#allocation9 + $0x40] sm:$0xff]
    %v445 = vld [vmem:[#allocation9 + $0x48] sm:$0xff]
    %v446 = vld [vmem:[#allocation9 + $0x50] sm:$0xff]
    %v447 = vld [vmem:[#allocation9 + $0x58] sm:$0xff]
    %v448 = vld [vmem:[#allocation9 + $0x60] sm:$0xff]
    %v449 = vld [vmem:[#allocation9 + $0x68] sm:$0xff]
    %v450 = vld [vmem:[#allocation9 + $0x70] sm:$0xff]
    %v451 = vld [vmem:[#allocation9 + $0x78] sm:$0xff]
    %v452 = vld [vmem:[%s8] sm:$0x1]
    %v454 = vlaneseq
    %v455 = vshrl.u32 %v454, 7
    %v456 = vsub.s32 0, %v455
    %v457 = vrot.slane %v452, %v456
    %459 = vmatprep.subr.mxu0 0.0
    %460 = vmatpush1.msra.mxu0 %v451
    %461 = vmatprep.subr.mxu0 0.0
    %462 = vmatpush1.msra.mxu0 %v450
    %463 = vmatprep.subr.mxu0 0.0
    %464 = vmatpush1.msra.mxu0 %v449
    %465 = vmatprep.subr.mxu0 0.0
    %466 = vmatpush1.msra.mxu0 %v448
    %467 = vmatprep.subr.mxu0 0.0
    %468 = vmatpush1.msra.mxu0 %v447
    %469 = vmatprep.subr.mxu0 0.0
    %470 = vmatpush1.msra.mxu0 %v446
    %471 = vmatprep.subr.mxu0 0.0
    %472 = vmatpush1.msra.mxu0 %v445
    %473 = vmatprep.subr.mxu0 0.0
    %474 = vmatpush1.msra.mxu0 %v444
    %475 = vmatprep.subr.mxu0 0.0
    %476 = vmatpush1.msra.mxu0 %v443
    %477 = vmatprep.subr.mxu0 0.0
    %478 = vmatpush1.msra.mxu0 %v442
    %479 = vmatprep.subr.mxu0 0.0
    %480 = vmatpush1.msra.mxu0 %v441
    %481 = vmatprep.subr.mxu0 0.0
    %482 = vmatpush1.msra.mxu0 %v440
    %483 = vmatprep.subr.mxu0 0.0
    %484 = vmatpush1.msra.mxu0 %v439
    %485 = vmatprep.subr.mxu0 0.0
    %486 = vmatpush1.msra.mxu0 %v438
    %487 = vmatprep.subr.mxu0 0.0
    %488 = vmatpush1.msra.mxu0 %v437
    %489 = vmatprep.subr.mxu0 0.0
    %490 = vmatpush1.msra.mxu0 %v436
    %491 = vmatprep.subr.mxu0 0.0
    %492 = vmatpush2.msra.mxu0 0.0
    %493 = vmatprep.subr.mxu0 0.0
    %494 = vmatpush2.msra.mxu0 0.0
    %495 = vmatprep.subr.mxu0 0.0
    %496 = vmatpush2.msra.mxu0 0.0
    %497 = vmatprep.subr.mxu0 0.0
    %498 = vmatpush2.msra.mxu0 0.0
    %499 = vmatprep.subr.mxu0 0.0
    %500 = vmatpush2.msra.mxu0 0.0
    %501 = vmatprep.subr.mxu0 0.0
    %502 = vmatpush2.msra.mxu0 0.0
    %503 = vmatprep.subr.mxu0 0.0
    %504 = vmatpush2.msra.mxu0 0.0
    %505 = vmatprep.subr.mxu0 0.0
    %506 = vmatpush2.msra.mxu0 0.0
    %507 = vmatprep.subr.mxu0 0.0
    %508 = vmatpush2.msra.mxu0 0.0
    %509 = vmatprep.subr.mxu0 0.0
    %510 = vmatpush2.msra.mxu0 0.0
    %511 = vmatprep.subr.mxu0 0.0
    %512 = vmatpush2.msra.mxu0 0.0
    %513 = vmatprep.subr.mxu0 0.0
    %514 = vmatpush2.msra.mxu0 0.0
    %515 = vmatprep.subr.mxu0 0.0
    %516 = vmatpush2.msra.mxu0 0.0
    %517 = vmatprep.subr.mxu0 0.0
    %518 = vmatpush2.msra.mxu0 0.0
    %519 = vmatprep.subr.mxu0 0.0
    %520 = vmatpush2.msra.mxu0 0.0
    %521 = vmatprep.subr.mxu0 0.0
    %522 = vmatpush2.msra.mxu0 0.0
    %523 = vmatprep.mubr.f32.mxu0 0.0
    %524 = vmatmul.mubr.f32.gmra.mxu0 %v435
    %v525 = vpop.f32.mrf.mxu0
    %v526 = vadd.f32 %v457, %v525
    %v527 = vpop.f32.mrf.mxu0
    %528 = vdwg.mxu0
    %529 = vst [vmem:[%s9] sm:$0xff] %v526
    // Predicated region
    $region50: #{dan_forward_bow.1} parent=1 // pred_check
      _
    $region51: #{dan_forward_bow.1} parent=1 // pred_check_branch
      %531 = sbr.rel (0) target = $region53
    $region52: #{dan_forward_bow.1} parent=1 // pred_region
      _
    $region53: #{dan_forward_bow.1} parent=1 // pred_fallthru
      _
    // Predicated region
    $region54: #{dan_forward_bow.1} parent=1 // pred_check
      _
    $region55: #{dan_forward_bow.1} parent=1 // pred_check_branch
      %533 = sbr.rel (0) target = $region57
    $region56: #{dan_forward_bow.1} parent=1 // pred_region
      _
    $region57: #{dan_forward_bow.1} parent=1 // pred_fallthru
      _
    %534 = vsyncpa [#allocation5], 1
    %535 = vsyncpa [#allocation7], 1
    %536 = vsyncpa [#allocation10], 1

</llo_original>
